<compile_context>
chip_gen: v7x
topology: tpu7x:2x2x1
jax: 0.10.0
libtpu: 0.0.40
codegen_flags: <defaults>
</compile_context>

<pallas_src>
import jax
import jax.numpy as jnp
from jax import lax
from jax.experimental import pallas as pl
from jax.experimental.pallas import tpu as pltpu


# ---------------------------------------------------------------------------
# Row-tiled linear kernels (bf16 MXU matmul, f32 accumulation, f32 bias epilogue)
# ---------------------------------------------------------------------------
def _linear_bias_kernel(x_ref, w_ref, b_ref, o_ref):
    acc = jnp.dot(x_ref[...], w_ref[...], preferred_element_type=jnp.float32)
    o_ref[...] = (acc + b_ref[...]).astype(o_ref.dtype)


def _qkv_fused_kernel(x_ref, w_ref, b_ref, q_ref, k_ref, v_ref):
    # One dot against the concatenated (Din, 3*D) weight; split the accumulator
    # into the three lane-aligned D-wide outputs (D is a multiple of 128).
    acc = jnp.dot(x_ref[...], w_ref[...], preferred_element_type=jnp.float32)
    acc = acc + b_ref[...]
    d = q_ref.shape[-1]
    q_ref[...] = acc[:, :d].astype(q_ref.dtype)
    k_ref[...] = acc[:, d:2 * d].astype(k_ref.dtype)
    v_ref[...] = acc[:, 2 * d:].astype(v_ref.dtype)


def _row_tile(n):
    # MXU-aligned row tile. Small N -> single block; large N -> 256 rows/step.
    # TODO(synk): bump to 512 on v6e (128 MiB VMEM headroom); for d_model >= ~4k
    #             add Dout/K grid axes instead of a fully resident weight block
    #             (v7x 64 MiB physical / v5e 16 MiB default scoped VMEM).
    return n if n <= 512 else 256


def pallas_linear(x2d, w, b, *, out_dtype, compute_dtype=jnp.bfloat16):
    """x2d: (N, Din); w: (Din, Dout) (transpose of torch nn.Linear.weight); b: (Dout,)."""
    N, Din = x2d.shape
    Dout = w.shape[1]
    tm = _row_tile(N)

    xc = x2d.astype(compute_dtype)
    wc = w.astype(compute_dtype)
    b2 = b.reshape(1, Dout).astype(jnp.float32)

    itm = jnp.dtype(compute_dtype).itemsize
    cost = pl.CostEstimate(
        flops=2 * N * Din * Dout, transcendentals=0,
        bytes_accessed=(N * Din + Din * Dout) * itm + Dout * 4
        + N * Dout * jnp.dtype(out_dtype).itemsize)

    return pl.pallas_call(
        _linear_bias_kernel,
        out_shape=jax.ShapeDtypeStruct((N, Dout), out_dtype),
        grid_spec=pltpu.PrefetchScalarGridSpec(
            num_scalar_prefetch=0,
            grid=(pl.cdiv(N, tm),),
            in_specs=[
                pl.BlockSpec((tm, Din), lambda i: (i, 0)),     # activation row tile
                pl.BlockSpec((Din, Dout), lambda i: (0, 0)),   # resident weight
                pl.BlockSpec((1, Dout), lambda i: (0, 0)),     # resident bias
            ],
            out_specs=pl.BlockSpec((tm, Dout), lambda i: (i, 0)),
        ),
        compiler_params=pltpu.CompilerParams(dimension_semantics=("parallel",)),
        cost_estimate=cost,
    )(xc, wc, b2)


def pallas_qkv_fused(x2d, wqkv, bqkv, *, d_model, out_dtype=jnp.bfloat16,
                     compute_dtype=jnp.bfloat16):
    """Fused q/k/v projection: one activation read, (Din, 3*D) weight, 3 outputs."""
    N, Din = x2d.shape
    tm = _row_tile(N)

    xc = x2d.astype(compute_dtype)
    wc = wqkv.astype(compute_dtype)
    b2 = bqkv.reshape(1, 3 * d_model).astype(jnp.float32)

    itm = jnp.dtype(compute_dtype).itemsize
    cost = pl.CostEstimate(
        flops=2 * N * Din * 3 * d_model, transcendentals=0,
        bytes_accessed=(N * Din + Din * 3 * d_model) * itm + 3 * d_model * 4
        + 3 * N * d_model * jnp.dtype(out_dtype).itemsize)

    out_struct = jax.ShapeDtypeStruct((N, d_model), out_dtype)
    return pl.pallas_call(
        _qkv_fused_kernel,
        out_shape=(out_struct, out_struct, out_struct),
        grid_spec=pltpu.PrefetchScalarGridSpec(
            num_scalar_prefetch=0,
            grid=(pl.cdiv(N, tm),),
            in_specs=[
                pl.BlockSpec((tm, Din), lambda i: (i, 0)),
                pl.BlockSpec((Din, 3 * d_model), lambda i: (0, 0)),
                pl.BlockSpec((1, 3 * d_model), lambda i: (0, 0)),
            ],
            out_specs=[
                pl.BlockSpec((tm, d_model), lambda i: (i, 0)),
                pl.BlockSpec((tm, d_model), lambda i: (i, 0)),
                pl.BlockSpec((tm, d_model), lambda i: (i, 0)),
            ],
        ),
        compiler_params=pltpu.CompilerParams(dimension_semantics=("parallel",)),
        cost_estimate=cost,
    )(xc, wc, b2)


# ---------------------------------------------------------------------------
# Scaled dot-product attention: one batch (all heads) per step, flash-style kv
# tiling, heads split/merged in-kernel via static lane slices (no HBM transposes).
# ---------------------------------------------------------------------------
def _make_sdpa_kernel(num_heads, depth, scale, has_mask):
    def kernel(*refs):
        if has_mask:
            q_ref, k_ref, v_ref, mask_ref, o_ref, m_sc, l_sc, acc_sc = refs
        else:
            q_ref, k_ref, v_ref, o_ref, m_sc, l_sc, acc_sc = refs

        kv = pl.program_id(1)

        @pl.when(kv == 0)
        def _init():
            m_sc[...] = jnp.full_like(m_sc, -jnp.inf)
            l_sc[...] = jnp.zeros_like(l_sc)
            acc_sc[...] = jnp.zeros_like(acc_sc)

        q = q_ref[0]                                   # (Sq, D)  bf16, lane-dense
        k = k_ref[0]                                   # (tk, D)
        v = v_ref[0]                                   # (tk, D)
        if has_mask:
            neg = mask_ref[0].astype(jnp.float32) * jnp.float32(-1e9)   # (Sq, tk)

        # Static unrolled loop over heads: each head is a `depth`-wide lane slice
        # of the lane-dense (., D) blocks (no (0,2,1,3) transposes in HBM).
        for h in range(num_heads):
            sl = slice(h * depth, (h + 1) * depth)
            qh = q[:, sl]                              # (Sq, depth)
            kh = k[:, sl]                              # (tk, depth)
            vh = v[:, sl]                              # (tk, depth)

            # q @ k^T without explicit transpose; bf16 operands, f32 accumulate.
            s = lax.dot_general(qh, kh, (((1,), (1,)), ((), ())),
                                preferred_element_type=jnp.float32) * scale
            if has_mask:
                s = s + neg

            m_prev = m_sc[h]                           # (Sq, 1) f32
            m_new = jnp.maximum(m_prev, jnp.max(s, axis=-1, keepdims=True))
            alpha = jnp.exp(m_prev - m_new)
            p = jnp.exp(s - m_new)                     # unnormalized probs (f32)
            l_sc[h] = alpha * l_sc[h] + jnp.sum(p, axis=-1, keepdims=True)
            acc_sc[h] = alpha * acc_sc[h] + jnp.dot(
                p.astype(vh.dtype), vh, preferred_element_type=jnp.float32)
            m_sc[h] = m_new

        @pl.when(kv == pl.num_programs(1) - 1)
        def _finalize():
            # Deferred softmax normalization: EUP reciprocal on (Sq, 1) per head,
            # applied to the accumulator instead of dividing p elementwise.
            parts = []
            for h in range(num_heads):
                inv_l = pl.reciprocal(l_sc[h], approx=True)
                parts.append(acc_sc[h] * inv_l)
            out = jnp.concatenate(parts, axis=-1)      # (Sq, D) heads merged, lane-dense
            o_ref[0] = out.astype(o_ref.dtype)

    return kernel


def _kv_tile(sk):
    if sk <= 512:
        return sk
    for t in (512, 384, 256, 128):
        if sk % t == 0:
            return t
    return sk  # TODO(synk): pad/mask ragged Sk instead of one full-Sk block.


def pallas_sdpa(qp, kp, vp, mask, num_heads, *, out_dtype=jnp.bfloat16):
    """qp: (B, Sq, D); kp/vp: (B, Sk, D) with heads packed in the last dim.
    mask: None or broadcastable to (B, 1, Sq, Sk) (additive convention * -1e9).
    Returns (B, Sq, D) with heads already merged."""
    B, Sq, D = qp.shape
    Sk = kp.shape[1]
    depth = D // num_heads
    scale = 1.0 / float(depth) ** 0.5
    tk = _kv_tile(Sk)
    num_kv = Sk // tk

    has_mask = mask is not None
    kernel = _make_sdpa_kernel(num_heads, depth, scale, has_mask)

    # TODO(synk): also tile Sq (extra "parallel" grid axis) for very long queries.
    in_specs = [
        pl.BlockSpec((1, Sq, D), lambda b, j: (b, 0, 0)),
        pl.BlockSpec((1, tk, D), lambda b, j: (b, j, 0)),
        pl.BlockSpec((1, tk, D), lambda b, j: (b, j, 0)),
    ]
    args = [qp, kp, vp]

    if has_mask:
        m4 = jnp.asarray(mask, jnp.float32)
        m4 = m4.reshape((1,) * (4 - m4.ndim) + m4.shape)
        if m4.shape[1] != 1:
            # TODO(synk): per-head masks would need a head-indexed mask stream.
            raise NotImplementedError("per-head masks not supported")
        mb = m4.shape[0]
        # Keep the mask at (1-or-B, Sq, Sk): VMEM-resident (constant / batch-only
        # index_map) instead of materializing a (B*H, Sq, Sk) broadcast in HBM.
        m3 = jnp.broadcast_to(m4, (mb, 1, Sq, Sk)).reshape(mb, Sq, Sk)
        if mb == 1:
            in_specs.append(pl.BlockSpec((1, Sq, tk), lambda b, j: (0, 0, j)))
        else:
            in_specs.append(pl.BlockSpec((1, Sq, tk), lambda b, j: (b, 0, j)))
        args.append(m3)

    return pl.pallas_call(
        kernel,
        out_shape=jax.ShapeDtypeStruct((B, Sq, D), out_dtype),
        grid_spec=pltpu.PrefetchScalarGridSpec(
            num_scalar_prefetch=0,
            grid=(B, num_kv),
            in_specs=in_specs,
            out_specs=pl.BlockSpec((1, Sq, D), lambda b, j: (b, 0, 0)),
            scratch_shapes=[
                pltpu.VMEM((num_heads, Sq, 1), jnp.float32),      # running max m
                pltpu.VMEM((num_heads, Sq, 1), jnp.float32),      # running sum l
                pltpu.VMEM((num_heads, Sq, depth), jnp.float32),  # output accumulator
            ],
        ),
        compiler_params=pltpu.CompilerParams(
            dimension_semantics=("parallel", "arbitrary")),
    )(*args)


# ---------------------------------------------------------------------------
# Full MultiHeadAttention forward.
# ---------------------------------------------------------------------------
def multi_head_attention(q, k, v, mask, params, num_heads):
    """params = (wq, bq, wk, bk, wv, bv, wo, bo); weights stored as (in, out),
    i.e. the transpose of torch nn.Linear.weight, so projection is x @ w + b."""
    wq, bq, wk, bk, wv, bv, wo, bo = params
    B, Sq, D = q.shape
    Sk = k.shape[1]

    if q is k and k is v:
        # Self-attention: fuse the three projections (one activation read, one launch).
        wqkv = jnp.concatenate([wq, wk, wv], axis=1)
        bqkv = jnp.concatenate([bq, bk, bv], axis=0)
        qp, kp, vp = pallas_qkv_fused(q.reshape(B * Sq, D), wqkv, bqkv, d_model=D)
        kp = kp.reshape(B, Sk, D)
        vp = vp.reshape(B, Sk, D)
    else:
        qp = pallas_linear(q.reshape(B * Sq, D), wq, bq, out_dtype=jnp.bfloat16)
        kp = pallas_linear(k.reshape(B * Sk, D), wk, bk,
                           out_dtype=jnp.bfloat16).reshape(B, Sk, D)
        vp = pallas_linear(v.reshape(B * Sk, D), wv, bv,
                           out_dtype=jnp.bfloat16).reshape(B, Sk, D)
    qp = qp.reshape(B, Sq, D)

    ctx = pallas_sdpa(qp, kp, vp, mask, num_heads)        # (B, Sq, D) heads merged
    out = pallas_linear(ctx.reshape(B * Sq, D), wo, bo, out_dtype=q.dtype)
    return out.reshape(B, Sq, D)


# ---------------------------------------------------------------------------
# Reference (plain JAX, f32) mirroring the PyTorch module.
# ---------------------------------------------------------------------------
def mha_reference(q, k, v, mask, params, num_heads):
    wq, bq, wk, bk, wv, bv, wo, bo = params
    B, Sq, D = q.shape
    Sk = k.shape[1]
    depth = D // num_heads
    qp = (q @ wq + bq).reshape(B, Sq, num_heads, depth).transpose(0, 2, 1, 3)
    kp = (k @ wk + bk).reshape(B, Sk, num_heads, depth).transpose(0, 2, 1, 3)
    vp = (v @ wv + bv).reshape(B, Sk, num_heads, depth).transpose(0, 2, 1, 3)
    logits = jnp.einsum("bhqd,bhkd->bhqk", qp, kp) / jnp.sqrt(jnp.float32(depth))
    if mask is not None:
        logits = logits + mask * -1e9
    w_att = jax.nn.softmax(logits, axis=-1)
    ctx = jnp.einsum("bhqk,bhkd->bhqd", w_att, vp)
    ctx = ctx.transpose(0, 2, 1, 3).reshape(B, Sq, D)
    return ctx @ wo + bo


if __name__ == "__main__":
    batch, seq, d_model, num_heads = 2, 8, 128, 4   # d_model multiple of 128 → lane-dense

    key = jax.random.PRNGKey(0)
    ks = jax.random.split(key, 12)
    wscale = 0.05

    x = jax.random.normal(ks[0], (batch, seq, d_model), jnp.float32)

    wq = jax.random.normal(ks[1], (d_model, d_model), jnp.float32) * wscale
    bq = jax.random.normal(ks[2], (d_model,), jnp.float32) * wscale
    wk = jax.random.normal(ks[3], (d_model, d_model), jnp.float32) * wscale
    bk = jax.random.normal(ks[4], (d_model,), jnp.float32) * wscale
    wv = jax.random.normal(ks[5], (d_model, d_model), jnp.float32) * wscale
    bv = jax.random.normal(ks[6], (d_model,), jnp.float32) * wscale
    wo = jax.random.normal(ks[7], (d_model, d_model), jnp.float32) * wscale
    bo = jax.random.normal(ks[8], (d_model,), jnp.float32) * wscale
    params = (wq, bq, wk, bk, wv, bv, wo, bo)

    # Causal mask in this module's convention: 1 where masked out (added * -1e9).
    mask = jnp.triu(jnp.ones((seq, seq), jnp.float32), k=1).reshape(1, 1, seq, seq)

    # 1) Self-attention with mask: fused-QKV path + masked (resident-mask) SDPA.
    out = multi_head_attention(x, x, x, mask, params, num_heads)
    out = jax.block_until_ready(out)
    ref = mha_reference(x, x, x, mask, params, num_heads)
    assert out.shape == (batch, seq, d_model)
    err = float(jnp.max(jnp.abs(out - ref)))
    # bf16 matmul operands (f32 accumulation) → modest tolerance vs f32 reference.
    assert jnp.allclose(out, ref, atol=3e-2, rtol=3e-2), err

    # 2) Cross-attention, no mask: separate projections + mask-free SDPA variant.
    q_in = jax.random.normal(ks[9], (batch, seq, d_model), jnp.float32)
    k_in = jax.random.normal(ks[10], (batch, seq, d_model), jnp.float32)
    v_in = jax.random.normal(ks[11], (batch, seq, d_model), jnp.float32)
    out2 = multi_head_attention(q_in, k_in, v_in, None, params, num_heads)
    out2 = jax.block_until_ready(out2)
    ref2 = mha_reference(q_in, k_in, v_in, None, params, num_heads)
    err2 = float(jnp.max(jnp.abs(out2 - ref2)))
    assert jnp.allclose(out2, ref2, atol=3e-2, rtol=3e-2), err2

    print("KERNEL_OK")
</pallas_src>

<mosaic_0001>
module attributes {stable_mosaic.version = 11 : i64} {
  func.func @_qkv_fused_kernel(%arg0: i32, %arg1: memref<16x128xbf16, #tpu.memory_space<vmem>>, %arg2: memref<128x384xbf16, #tpu.memory_space<vmem>>, %arg3: memref<1x384xf32, #tpu.memory_space<vmem>>, %arg4: memref<16x128xbf16, #tpu.memory_space<vmem>>, %arg5: memref<16x128xbf16, #tpu.memory_space<vmem>>, %arg6: memref<16x128xbf16, #tpu.memory_space<vmem>>) attributes {dimension_semantics = [#tpu.dimension_semantics<parallel>], iteration_bounds = array<i64: 1>, scalar_prefetch = 0 : i64, scratch_operands = 0 : i64, tpu.core_type = #tpu.core_type<tc>, window_params = [{transform_indices = @transform_0, window_bounds = array<i64: 16, 128>}, {pipeline_mode = #tpu.pipeline_mode<synchronous>, transform_indices = @transform_1, window_bounds = array<i64: 128, 384>}, {pipeline_mode = #tpu.pipeline_mode<synchronous>, transform_indices = @transform_2, window_bounds = array<i64: 1, 384>}, {transform_indices = @transform_3, window_bounds = array<i64: 16, 128>}, {transform_indices = @transform_4, window_bounds = array<i64: 16, 128>}, {transform_indices = @transform_5, window_bounds = array<i64: 16, 128>}]} {
    %c0 = arith.constant 0 : index
    %c0_0 = arith.constant 0 : index
    %0 = vector.load %arg1[%c0, %c0_0] : memref<16x128xbf16, #tpu.memory_space<vmem>>, vector<16x128xbf16>
    %c0_1 = arith.constant 0 : index
    %c0_2 = arith.constant 0 : index
    %1 = vector.load %arg2[%c0_1, %c0_2] : memref<128x384xbf16, #tpu.memory_space<vmem>>, vector<128x384xbf16>
    %cst = arith.constant dense<0.000000e+00> : vector<16x384xf32>
    %2 = tpu.matmul %0, %1, %cst {dimension_numbers = #tpu.dot_dimension_numbers<[1], [0], [0], [1], [0, 0, 1, 1], [], []>} : vector<16x128xbf16>, vector<128x384xbf16>, vector<16x384xf32> -> vector<16x384xf32>
    %c0_3 = arith.constant 0 : index
    %c0_4 = arith.constant 0 : index
    %3 = vector.load %arg3[%c0_3, %c0_4] : memref<1x384xf32, #tpu.memory_space<vmem>>, vector<1x384xf32>
    %4 = vector.broadcast %3 : vector<1x384xf32> to vector<16x384xf32>
    %5 = arith.addf %2, %4 : vector<16x384xf32>
    %6 = vector.extract_strided_slice %5 {offsets = [0, 0], sizes = [16, 128], strides = [1, 1]} : vector<16x384xf32> to vector<16x128xf32>
    %7 = arith.truncf %6 : vector<16x128xf32> to vector<16x128xbf16>
    %c0_5 = arith.constant 0 : index
    %c0_6 = arith.constant 0 : index
    %8 = vector.load %arg4[%c0_5, %c0_6] : memref<16x128xbf16, #tpu.memory_space<vmem>>, vector<16x128xbf16>
    tpu.vector_store %arg4[%c0_5, %c0_6], %7 {strides = array<i32>} : memref<16x128xbf16, #tpu.memory_space<vmem>>, vector<16x128xbf16>,
    %9 = vector.extract_strided_slice %5 {offsets = [0, 128], sizes = [16, 128], strides = [1, 1]} : vector<16x384xf32> to vector<16x128xf32>
    %10 = arith.truncf %9 : vector<16x128xf32> to vector<16x128xbf16>
    %c0_7 = arith.constant 0 : index
    %c0_8 = arith.constant 0 : index
    %11 = vector.load %arg5[%c0_7, %c0_8] : memref<16x128xbf16, #tpu.memory_space<vmem>>, vector<16x128xbf16>
    tpu.vector_store %arg5[%c0_7, %c0_8], %10 {strides = array<i32>} : memref<16x128xbf16, #tpu.memory_space<vmem>>, vector<16x128xbf16>,
    %12 = vector.extract_strided_slice %5 {offsets = [0, 256], sizes = [16, 128], strides = [1, 1]} : vector<16x384xf32> to vector<16x128xf32>
    %13 = arith.truncf %12 : vector<16x128xf32> to vector<16x128xbf16>
    %c0_9 = arith.constant 0 : index
    %c0_10 = arith.constant 0 : index
    %14 = vector.load %arg6[%c0_9, %c0_10] : memref<16x128xbf16, #tpu.memory_space<vmem>>, vector<16x128xbf16>
    tpu.vector_store %arg6[%c0_9, %c0_10], %13 {strides = array<i32>} : memref<16x128xbf16, #tpu.memory_space<vmem>>, vector<16x128xbf16>,
    return
  }
  func.func @transform_0(%arg0: i32) -> (i32, i32) {
    %c0_i32 = arith.constant 0 : i32
    %c0_i32_0 = arith.constant 0 : i32
    return %arg0, %c0_i32 : i32, i32
  }
  func.func @transform_1(%arg0: i32) -> (i32, i32) {
    %c0_i32 = arith.constant 0 : i32
    %c0_i32_0 = arith.constant 0 : i32
    %c0_i32_1 = arith.constant 0 : i32
    return %c0_i32, %c0_i32_0 : i32, i32
  }
  func.func @transform_2(%arg0: i32) -> (i32, i32) {
    %c0_i32 = arith.constant 0 : i32
    %c0_i32_0 = arith.constant 0 : i32
    %c0_i32_1 = arith.constant 0 : i32
    return %c0_i32, %c0_i32_0 : i32, i32
  }
  func.func @transform_3(%arg0: i32) -> (i32, i32) {
    %c0_i32 = arith.constant 0 : i32
    %c0_i32_0 = arith.constant 0 : i32
    return %arg0, %c0_i32 : i32, i32
  }
  func.func @transform_4(%arg0: i32) -> (i32, i32) {
    %c0_i32 = arith.constant 0 : i32
    %c0_i32_0 = arith.constant 0 : i32
    return %arg0, %c0_i32 : i32, i32
  }
  func.func @transform_5(%arg0: i32) -> (i32, i32) {
    %c0_i32 = arith.constant 0 : i32
    %c0_i32_0 = arith.constant 0 : i32
    return %arg0, %c0_i32 : i32, i32
  }
}

</mosaic_0001>

<llo_original>
// kernel: tpu_custom_call.1
$region0: #{tpu_custom_call.1}
  #allocation0 [shape = 'u32[]', space=smem, size = 0x4, offset = 0x4, fixed_abs, tag = 'smem constant byte address 0x4 - core index']
  #allocation1 [shape = 'u32[144,128]{1,0:T(1,128)}', space=vmem, size = 0x12000, scoped, tag = 'internal scratch']
  %s0 = inlined_call_operand.hbm [shape: bf16[16,128], index: 0, kind: input, shape index: {}]
  %s1 = inlined_call_operand.hbm [shape: bf16[128,384], index: 1, kind: input, shape index: {}]
  %s2 = inlined_call_operand.vmem [shape: f32[1,384], index: 2, kind: input, shape index: {}]
  %s3 = inlined_call_operand.hbm [shape: bf16[16,128], index: 3, kind: output, shape index: {0}]
  %s4 = inlined_call_operand.hbm [shape: bf16[16,128], index: 4, kind: output, shape index: {1}]
  %s5 = inlined_call_operand.hbm [shape: bf16[16,128], index: 5, kind: output, shape index: {2}]
  %6 = xla_tuple %s3, %s4, %s5
  %s7 = sld [smem:[#allocation0]]
  $region46: #{tpu_custom_call.1} parent=0
    _
  %s9 = ssub.s32 1, %s7
  %s10 = scalar_select 0, %s9, %s7
  $region1: #{tpu_custom_call.1} parent=0
    #allocation2 [shape = 'u8[4096]{0}', space=vmem, size = 0x1000, scoped, tag = 'input window, operand 0, single buffered']
    #allocation3 [shape = 's32[1]{0}', space=sflag, size = 0x4, scoped, tag = 'scoped memory for tpu_custom_call.1']
    #allocation4 [shape = 's32[1]{0}', space=sflag, size = 0x4, scoped, tag = 'scoped memory for tpu_custom_call.1']
    #allocation5 [shape = 'u8[98304]{0}', space=vmem, size = 0x18000, scoped, tag = 'input window, operand 1, single buffered']
    #allocation6 [shape = 's32[1]{0}', space=sflag, size = 0x4, scoped, tag = 'scoped memory for tpu_custom_call.1']
    #allocation7 [shape = 'u8[4096]{0}', space=vmem, size = 0x1000, scoped, tag = 'output window, operand 0, single buffered']
    #allocation8 [shape = 'u8[4096]{0}', space=vmem, size = 0x1000, scoped, tag = 'output window, operand 1, single buffered']
    #allocation9 [shape = 's32[1]{0}', space=sflag, size = 0x4, scoped, tag = 'scoped memory for tpu_custom_call.1']
    #allocation10 [shape = 'u8[4096]{0}', space=vmem, size = 0x1000, scoped, tag = 'output window, operand 2, single buffered']
    %11 = vsyncpa [#allocation3], 0
    %12 = vsyncpa [#allocation6], 0
    %13 = vsyncpa [#allocation4], 0
    %14 = vsyncpa [#allocation9], 0
    // Predicated region
    $region2: #{tpu_custom_call.1} parent=1 // pred_check
      _
    $region3: #{tpu_custom_call.1} parent=1 // pred_check_branch
      %16 = sbr.rel (0) target = $region5
    $region4: #{tpu_custom_call.1} parent=1 // pred_region
      %s18 = ssub.s32 128, 128
      %19 = vsyncadd [#allocation3], %s18
      %s20 = sshll.u32 [#allocation2], 4
      %s21 = int_to_ptr.vmem [resolvable:$true] %s20
      %26 = dma.hbm_to_vmem [thread:$0]  %s0, 128, %s21, [#allocation3], 64, 64, 4
    $region5: #{tpu_custom_call.1} parent=1 // pred_fallthru
      _
    // Predicated region
    $region6: #{tpu_custom_call.1} parent=1 // pred_check
      _
    $region7: #{tpu_custom_call.1} parent=1 // pred_check_branch
      %28 = sbr.rel (0) target = $region9
    $region8: #{tpu_custom_call.1} parent=1 // pred_region
      %s30 = ssub.s32 3072, 3072
      %31 = vsyncadd [#allocation6], %s30
      %s32 = sshll.u32 [#allocation5], 4
      %s33 = int_to_ptr.vmem [resolvable:$true] %s32
      %38 = dma.hbm_to_vmem [thread:$0]  %s1, 3072, %s33, [#allocation6], 192, 192, 12
    $region9: #{tpu_custom_call.1} parent=1 // pred_fallthru
      _
    // Predicated region
    $region10: #{tpu_custom_call.1} parent=1 // pred_check
      _
    $region11: #{tpu_custom_call.1} parent=1 // pred_check_branch
      %40 = sbr.rel (0) target = $region13
    $region12: #{tpu_custom_call.1} parent=1 // pred_region
      _
    $region13: #{tpu_custom_call.1} parent=1 // pred_fallthru
      _
    // Predicated region
    $region14: #{tpu_custom_call.1} parent=1 // pred_check
      _
    $region15: #{tpu_custom_call.1} parent=1 // pred_check_branch
      %42 = sbr.rel (0) target = $region17
    $region16: #{tpu_custom_call.1} parent=1 // pred_region
      %43 = dma.done [#allocation3], 128
    $region17: #{tpu_custom_call.1} parent=1 // pred_fallthru
      _
    // Predicated region
    $region18: #{tpu_custom_call.1} parent=1 // pred_check
      _
    $region19: #{tpu_custom_call.1} parent=1 // pred_check_branch
      %45 = sbr.rel (0) target = $region21
    $region20: #{tpu_custom_call.1} parent=1 // pred_region
      %46 = dma.done [#allocation6], 3072
    $region21: #{tpu_custom_call.1} parent=1 // pred_fallthru
      _
    %v48 = vld [vmem:[#allocation2] sm:$0xf]
    %v49 = vld [vmem:[#allocation2 + $0x4] sm:$0xf]
    %v50 = vld [vmem:[#allocation5] sm:$0xff]
    %v51 = vld [vmem:[#allocation5 + $0x8] sm:$0xf]
    %v52 = vld [vmem:[#allocation5 + $0xc] sm:$0xff]
    %v53 = vld [vmem:[#allocation5 + $0x14] sm:$0xf]
    %v54 = vld [vmem:[#allocation5 + $0x18] sm:$0xff]
    %v55 = vld [vmem:[#allocation5 + $0x20] sm:$0xf]
    %v56 = vld [vmem:[#allocation5 + $0x24] sm:$0xff]
    %v57 = vld [vmem:[#allocation5 + $0x2c] sm:$0xf]
    %v58 = vld [vmem:[#allocation5 + $0x30] sm:$0xff]
    %v59 = vld [vmem:[#allocation5 + $0x38] sm:$0xf]
    %v60 = vld [vmem:[#allocation5 + $0x3c] sm:$0xff]
    %v61 = vld [vmem:[#allocation5 + $0x44] sm:$0xf]
    %v62 = vld [vmem:[#allocation5 + $0x48] sm:$0xff]
    %v63 = vld [vmem:[#allocation5 + $0x50] sm:$0xf]
    %v64 = vld [vmem:[#allocation5 + $0x54] sm:$0xff]
    %v65 = vld [vmem:[#allocation5 + $0x5c] sm:$0xf]
    %v66 = vld [vmem:[#allocation5 + $0x60] sm:$0xff]
    %v67 = vld [vmem:[#allocation5 + $0x68] sm:$0xf]
    %v68 = vld [vmem:[#allocation5 + $0x6c] sm:$0xff]
    %v69 = vld [vmem:[#allocation5 + $0x74] sm:$0xf]
    %v70 = vld [vmem:[#allocation5 + $0x78] sm:$0xff]
    %v71 = vld [vmem:[#allocation5 + $0x80] sm:$0xf]
    %v72 = vld [vmem:[#allocation5 + $0x84] sm:$0xff]
    %v73 = vld [vmem:[#allocation5 + $0x8c] sm:$0xf]
    %v74 = vld [vmem:[#allocation5 + $0x90] sm:$0xff]
    %v75 = vld [vmem:[#allocation5 + $0x98] sm:$0xf]
    %v76 = vld [vmem:[#allocation5 + $0x9c] sm:$0xff]
    %v77 = vld [vmem:[#allocation5 + $0xa4] sm:$0xf]
    %v78 = vld [vmem:[#allocation5 + $0xa8] sm:$0xff]
    %v79 = vld [vmem:[#allocation5 + $0xb0] sm:$0xf]
    %v80 = vld [vmem:[#allocation5 + $0xb4] sm:$0xff]
    %v81 = vld [vmem:[#allocation5 + $0xbc] sm:$0xf]
    %v82 = vld [vmem:[%s2] sm:$0x7]
    %v84 = vlaneseq
    %v85 = vshrl.u32 %v84, 7
    %v86 = vsub.s32 0, %v85
    %v87 = vrot.slane %v82, %v86
    %v88 = vlaneseq
    %v89 = vshrl.u32 %v88, 7
    %v90 = vsub.s32 1, %v89
    %v91 = vrot.slane %v82, %v90
    %v92 = vlaneseq
    %v93 = vshrl.u32 %v92, 7
    %v94 = vsub.s32 2, %v93
    %v95 = vrot.slane %v82, %v94
    %v101 = vunpack.c.l.b16 %v48
    %v102 = vunpack.c.l.b16 %v49
    %v103 = vpack.c.b16 %v102, %v101
    %v137 = vunpack.c.l.b16 %v50
    %v138 = vunpack.c.h.b16 %v50
    %v139 = vunpack.c.l.b16 %v51
    %v140 = vunpack.c.l.b16 %v52
    %v141 = vunpack.c.h.b16 %v52
    %v142 = vunpack.c.l.b16 %v53
    %v143 = vunpack.c.l.b16 %v54
    %v144 = vunpack.c.h.b16 %v54
    %v145 = vunpack.c.l.b16 %v55
    %v146 = vunpack.c.l.b16 %v56
    %v147 = vunpack.c.h.b16 %v56
    %v148 = vunpack.c.l.b16 %v57
    %v149 = vunpack.c.l.b16 %v58
    %v150 = vunpack.c.h.b16 %v58
    %v151 = vunpack.c.l.b16 %v59
    %v152 = vunpack.c.l.b16 %v60
    %v153 = vunpack.c.h.b16 %v60
    %v154 = vunpack.c.l.b16 %v61
    %v155 = vunpack.c.l.b16 %v62
    %v156 = vunpack.c.h.b16 %v62
    %v157 = vunpack.c.l.b16 %v63
    %v158 = vunpack.c.l.b16 %v64
    %v159 = vunpack.c.h.b16 %v64
    %v160 = vunpack.c.l.b16 %v65
    %v161 = vunpack.c.l.b16 %v66
    %v162 = vunpack.c.h.b16 %v66
    %v163 = vunpack.c.l.b16 %v67
    %v164 = vunpack.c.l.b16 %v68
    %v165 = vunpack.c.h.b16 %v68
    %v166 = vunpack.c.l.b16 %v69
    %v167 = vunpack.c.l.b16 %v70
    %v168 = vunpack.c.h.b16 %v70
    %v169 = vunpack.c.l.b16 %v71
    %v170 = vunpack.c.l.b16 %v72
    %v171 = vunpack.c.h.b16 %v72
    %v172 = vunpack.c.l.b16 %v73
    %v173 = vunpack.c.l.b16 %v74
    %v174 = vunpack.c.h.b16 %v74
    %v175 = vunpack.c.l.b16 %v75
    %v176 = vunpack.c.l.b16 %v76
    %v177 = vunpack.c.h.b16 %v76
    %v178 = vunpack.c.l.b16 %v77
    %v179 = vunpack.c.l.b16 %v78
    %v180 = vunpack.c.h.b16 %v78
    %v181 = vunpack.c.l.b16 %v79
    %v182 = vunpack.c.l.b16 %v80
    %v183 = vunpack.c.h.b16 %v80
    %v184 = vunpack.c.l.b16 %v81
    %v185 = vpack.c.b16 %v140, %v137
    %v186 = vpack.c.b16 %v141, %v138
    %v187 = vpack.c.b16 %v142, %v139
    %v188 = vpack.c.b16 %v146, %v143
    %v189 = vpack.c.b16 %v147, %v144
    %v190 = vpack.c.b16 %v148, %v145
    %v191 = vpack.c.b16 %v152, %v149
    %v192 = vpack.c.b16 %v153, %v150
    %v193 = vpack.c.b16 %v154, %v151
    %v194 = vpack.c.b16 %v158, %v155
    %v195 = vpack.c.b16 %v159, %v156
    %v196 = vpack.c.b16 %v160, %v157
    %v197 = vpack.c.b16 %v164, %v161
    %v198 = vpack.c.b16 %v165, %v162
    %v199 = vpack.c.b16 %v166, %v163
    %v200 = vpack.c.b16 %v170, %v167
    %v201 = vpack.c.b16 %v171, %v168
    %v202 = vpack.c.b16 %v172, %v169
    %v203 = vpack.c.b16 %v176, %v173
    %v204 = vpack.c.b16 %v177, %v174
    %v205 = vpack.c.b16 %v178, %v175
    %v206 = vpack.c.b16 %v182, %v179
    %v207 = vpack.c.b16 %v183, %v180
    %v208 = vpack.c.b16 %v184, %v181
    %233 = vmatprep.subr.bf16.mxu0 %v186
    %234 = vmatpush1.bf16.msra.mxu0 %v185
    %235 = vmatprep.subr.bf16.mxu0 %v189
    %236 = vmatpush1.bf16.msra.mxu0 %v188
    %237 = vmatprep.subr.bf16.mxu0 %v192
    %238 = vmatpush1.bf16.msra.mxu0 %v191
    %239 = vmatprep.subr.bf16.mxu0 %v195
    %240 = vmatpush1.bf16.msra.mxu0 %v194
    %241 = vmatprep.subr.bf16.mxu0 %v198
    %242 = vmatpush1.bf16.msra.mxu0 %v197
    %243 = vmatprep.subr.bf16.mxu0 %v201
    %244 = vmatpush1.bf16.msra.mxu0 %v200
    %245 = vmatprep.subr.bf16.mxu0 %v204
    %246 = vmatpush1.bf16.msra.mxu0 %v203
    %247 = vmatprep.subr.bf16.mxu0 %v207
    %248 = vmatpush1.bf16.msra.mxu0 %v206
    %249 = vmatprep.subr.bf16.mxu0 0
    %250 = vmatpush1.bf16.msra.mxu0 0
    %251 = vmatprep.subr.bf16.mxu0 0
    %252 = vmatpush1.bf16.msra.mxu0 0
    %253 = vmatprep.subr.bf16.mxu0 0
    %254 = vmatpush1.bf16.msra.mxu0 0
    %255 = vmatprep.subr.bf16.mxu0 0
    %256 = vmatpush1.bf16.msra.mxu0 0
    %257 = vmatprep.subr.bf16.mxu0 0
    %258 = vmatpush1.bf16.msra.mxu0 0
    %259 = vmatprep.subr.bf16.mxu0 0
    %260 = vmatpush1.bf16.msra.mxu0 0
    %261 = vmatprep.subr.bf16.mxu0 0
    %262 = vmatpush1.bf16.msra.mxu0 0
    %263 = vmatprep.subr.bf16.mxu0 0
    %264 = vmatpush1.bf16.msra.mxu0 0
    %265 = vmatprep.mubr.bf16.mxu0 0
    %266 = vmatmul.mubr.bf16.gmra.mrb[0].mxu0 %v103
    %v267 = vpop.f32.mrb[0].mxu0
    %v268 = vadd.f32 %v87, %v267
    %v269 = vpop.f32.mrb[0].mxu0
    %v270 = vadd.f32 %v91, %v269
    %v271 = vpop.f32.mrb[0].mxu0
    %v272 = vadd.f32 %v87, %v271
    %v273 = vpop.f32.mrb[0].mxu0
    %v274 = vadd.f32 %v91, %v273
    %275 = vdwg.mxu0
    %276 = vmatprep.subr.bf16.mxu0 0
    %277 = vmatpush1.bf16.msra.mxu0 %v187
    %278 = vmatprep.subr.bf16.mxu0 0
    %279 = vmatpush1.bf16.msra.mxu0 %v190
    %280 = vmatprep.subr.bf16.mxu0 0
    %281 = vmatpush1.bf16.msra.mxu0 %v193
    %282 = vmatprep.subr.bf16.mxu0 0
    %283 = vmatpush1.bf16.msra.mxu0 %v196
    %284 = vmatprep.subr.bf16.mxu0 0
    %285 = vmatpush1.bf16.msra.mxu0 %v199
    %286 = vmatprep.subr.bf16.mxu0 0
    %287 = vmatpush1.bf16.msra.mxu0 %v202
    %288 = vmatprep.subr.bf16.mxu0 0
    %289 = vmatpush1.bf16.msra.mxu0 %v205
    %290 = vmatprep.subr.bf16.mxu0 0
    %291 = vmatpush1.bf16.msra.mxu0 %v208
    %292 = vmatprep.subr.bf16.mxu0 0
    %293 = vmatpush1.bf16.msra.mxu0 0
    %294 = vmatprep.subr.bf16.mxu0 0
    %295 = vmatpush1.bf16.msra.mxu0 0
    %296 = vmatprep.subr.bf16.mxu0 0
    %297 = vmatpush1.bf16.msra.mxu0 0
    %298 = vmatprep.subr.bf16.mxu0 0
    %299 = vmatpush1.bf16.msra.mxu0 0
    %300 = vmatprep.subr.bf16.mxu0 0
    %301 = vmatpush1.bf16.msra.mxu0 0
    %302 = vmatprep.subr.bf16.mxu0 0
    %303 = vmatpush1.bf16.msra.mxu0 0
    %304 = vmatprep.subr.bf16.mxu0 0
    %305 = vmatpush1.bf16.msra.mxu0 0
    %306 = vmatprep.subr.bf16.mxu0 0
    %307 = vmatpush1.bf16.msra.mxu0 0
    %308 = vmatprep.mubr.bf16.mxu0 0
    %309 = vmatmul.mubr.bf16.gmra.mrb[0].mxu0 %v103
    %v310 = vpop.f32.mrb[0].mxu0
    %v311 = vadd.f32 %v95, %v310
    %v312 = vpop.f32.mrb[0].mxu0
    %v313 = vpop.f32.mrb[0].mxu0
    %v314 = vadd.f32 %v95, %v313
    %v315 = vpop.f32.mrb[0].mxu0
    %316 = vdwg.mxu0
    %v317 = vpack.c.bf16 %v272, %v268
    %v319 = vunpack.c.l.b16 %v317
    %v320 = vunpack.c.h.b16 %v317
    %v321 = vpack.c.b16 %v319, %v319
    %v322 = vpack.c.b16 %v320, %v320
    %325 = vst [vmem:[#allocation7] sm:$0xf] %v321
    %326 = vst [vmem:[#allocation7 + $0x4] sm:$0xf] %v322
    %v327 = vpack.c.bf16 %v274, %v270
    %v329 = vunpack.c.l.b16 %v327
    %v330 = vunpack.c.h.b16 %v327
    %v331 = vpack.c.b16 %v329, %v329
    %v332 = vpack.c.b16 %v330, %v330
    %335 = vst [vmem:[#allocation8] sm:$0xf] %v331
    %336 = vst [vmem:[#allocation8 + $0x4] sm:$0xf] %v332
    %v337 = vpack.c.bf16 %v314, %v311
    %v339 = vunpack.c.l.b16 %v337
    %v340 = vunpack.c.h.b16 %v337
    %v341 = vpack.c.b16 %v339, %v339
    %v342 = vpack.c.b16 %v340, %v340
    %345 = vst [vmem:[#allocation10] sm:$0xf] %v341
    %346 = vst [vmem:[#allocation10 + $0x4] sm:$0xf] %v342
    // Predicated region
    $region22: #{tpu_custom_call.1} parent=1 // pred_check
      _
    $region23: #{tpu_custom_call.1} parent=1 // pred_check_branch
      %348 = sbr.rel (0) target = $region25
    $region24: #{tpu_custom_call.1} parent=1 // pred_region
      %s350 = ssub.s32 128, 128
      %351 = vsyncadd [#allocation4], %s350
      %s352 = sshll.u32 [#allocation7], 4
      %s353 = int_to_ptr.vmem [resolvable:$true] %s352
      %358 = dma.vmem_to_hbm [thread:$0]  %s353, 128, %s3, [#allocation4], 64, 64, 4
    $region25: #{tpu_custom_call.1} parent=1 // pred_fallthru
      _
    // Predicated region
    $region26: #{tpu_custom_call.1} parent=1 // pred_check
      _
    $region27: #{tpu_custom_call.1} parent=1 // pred_check_branch
      %360 = sbr.rel (0) target = $region29
    $region28: #{tpu_custom_call.1} parent=1 // pred_region
      %s362 = ssub.s32 128, 128
      %363 = vsyncadd [#allocation9], %s362
      %s364 = sshll.u32 [#allocation8], 4
      %s365 = int_to_ptr.vmem [resolvable:$true] %s364
      %370 = dma.vmem_to_hbm [thread:$0]  %s365, 128, %s4, [#allocation9], 64, 64, 4
    $region29: #{tpu_custom_call.1} parent=1 // pred_fallthru
      _
    // Predicated region
    $region30: #{tpu_custom_call.1} parent=1 // pred_check
      _
    $region31: #{tpu_custom_call.1} parent=1 // pred_check_branch
      %372 = sbr.rel (0) target = $region33
    $region32: #{tpu_custom_call.1} parent=1 // pred_region
      %s374 = ssub.s32 128, 128
      %375 = vsyncadd [#allocation9], %s374
      %s376 = sshll.u32 [#allocation10], 4
      %s377 = int_to_ptr.vmem [resolvable:$true] %s376
      %382 = dma.vmem_to_hbm [thread:$0]  %s377, 128, %s5, [#allocation9], 64, 64, 4
    $region33: #{tpu_custom_call.1} parent=1 // pred_fallthru
      _
    // Predicated region
    $region34: #{tpu_custom_call.1} parent=1 // pred_check
      _
    $region35: #{tpu_custom_call.1} parent=1 // pred_check_branch
      %384 = sbr.rel (0) target = $region37
    $region36: #{tpu_custom_call.1} parent=1 // pred_region
      %385 = dma.done [#allocation4], 128
    $region37: #{tpu_custom_call.1} parent=1 // pred_fallthru
      _
    // Predicated region
    $region38: #{tpu_custom_call.1} parent=1 // pred_check
      _
    $region39: #{tpu_custom_call.1} parent=1 // pred_check_branch
      %387 = sbr.rel (0) target = $region41
    $region40: #{tpu_custom_call.1} parent=1 // pred_region
      %388 = dma.done [#allocation9], 128
    $region41: #{tpu_custom_call.1} parent=1 // pred_fallthru
      _
    // Predicated region
    $region42: #{tpu_custom_call.1} parent=1 // pred_check
      _
    $region43: #{tpu_custom_call.1} parent=1 // pred_check_branch
      %390 = sbr.rel (0) target = $region45
    $region44: #{tpu_custom_call.1} parent=1 // pred_region
      %391 = dma.done [#allocation9], 128
    $region45: #{tpu_custom_call.1} parent=1 // pred_fallthru
      _
    %392 = vsyncpa [#allocation3], 1
    %393 = vsyncpa [#allocation6], 1
    %394 = vsyncpa [#allocation4], 1
    %395 = vsyncpa [#allocation9], 1

</llo_original>
